<compile_context>
chip_gen: v7x
topology: tpu7x:2x2x1
jax: 0.10.0
libtpu: 0.0.40
codegen_flags: <defaults>
</compile_context>

<pallas_src>
import jax
import jax.numpy as jnp
from jax.experimental import pallas as pl
from jax.experimental.pallas import tpu as pltpu


def se_kernel(x_ref, w1t_ref, w2t_ref, o_ref):
    # x_ref:   (Bt, C, HW)  batch-tile, spatial flattened (native dtype)
    # w1t_ref: (C, Cr)      fc1 weight, pre-transposed (PyTorch Linear weight.T)
    # w2t_ref: (Cr, C)      fc2 weight, pre-transposed
    # o_ref:   (Bt, C, HW)
    hw = x_ref.shape[-1]

    # Squeeze: global average pool over spatial dims, f32-accumulated without
    # materializing an f32 copy of the whole tile.
    y = jnp.sum(x_ref[...], axis=-1, dtype=jnp.float32) * (1.0 / hw)   # (Bt, C)

    # Excite: FC -> ReLU -> FC -> hsigmoid, batched over the Bt rows.
    # Weights stay in their native dtype; accumulate in f32 on the MXU.
    h = jnp.dot(y.astype(w1t_ref.dtype), w1t_ref[...],
                preferred_element_type=jnp.float32)                    # (Bt, Cr)
    h = jnp.maximum(h, 0.0)                                            # ReLU
    z = jnp.dot(h.astype(w2t_ref.dtype), w2t_ref[...],
                preferred_element_type=jnp.float32)                    # (Bt, C)
    s = jnp.clip(z + 3.0, 0.0, 6.0) * (1.0 / 6.0)                      # hsigmoid

    # Scale: broadcast per-channel gate over spatial positions, in the tile's
    # native dtype (gate cast once).
    o_ref[...] = x_ref[...] * s[:, :, None].astype(o_ref.dtype)


def _choose_batch_tile(b, per_batch_bytes, target_bytes):
    """Largest divisor of b whose block fits target_bytes, while keeping at
    least 2 grid steps when b >= 2 (so both TensorCores get work on v7x)."""
    divisors = [d for d in range(1, b + 1) if b % d == 0]
    if b >= 2:
        divisors = [d for d in divisors if b // d >= 2]
    fitting = [d for d in divisors if d * per_batch_bytes <= target_bytes]
    return max(fitting) if fitting else min(divisors)


def se_module(x, w1, w2, *, target_block_bytes=2 << 20):
    """x: (B, C, H, W) NCHW. w1: (C//r, C), w2: (C, C//r) — PyTorch Linear weights."""
    b, c, hgt, wid = x.shape
    cr = w1.shape[0]
    hw = hgt * wid
    x_flat = x.reshape(b, c, hw)
    w1t = w1.T  # (C, Cr)
    w2t = w2.T  # (Cr, C)

    per_batch_bytes = c * hw * jnp.dtype(x.dtype).itemsize
    bt = _choose_batch_tile(b, per_batch_bytes, target_block_bytes)
    grid = b // bt

    # VMEM budget: double-buffered (input + output) blocks + resident weights
    # + slack; clamp to a range that is safe on all generations (<= 48 MiB).
    block_bytes = bt * per_batch_bytes
    weight_bytes = (w1.size + w2.size) * jnp.dtype(w1.dtype).itemsize
    vmem_needed = 2 * 2 * block_bytes + 2 * weight_bytes + (2 << 20)
    vmem_limit = int(max(min(vmem_needed, 48 << 20), 16 << 20))

    out = pl.pallas_call(
        se_kernel,
        out_shape=jax.ShapeDtypeStruct((b, c, hw), x.dtype),
        grid_spec=pltpu.PrefetchScalarGridSpec(
            num_scalar_prefetch=0,
            grid=(grid,),
            in_specs=[
                pl.BlockSpec((bt, c, hw), lambda i: (i, 0, 0)),
                pl.BlockSpec((c, cr), lambda i: (0, 0)),
                pl.BlockSpec((cr, c), lambda i: (0, 0)),
            ],
            out_specs=pl.BlockSpec((bt, c, hw), lambda i: (i, 0, 0)),
        ),
        compiler_params=pltpu.CompilerParams(
            dimension_semantics=("parallel",),
            vmem_limit_bytes=vmem_limit,
        ),
    )(x_flat, w1t, w2t)

    return out.reshape(b, c, hgt, wid)


def se_reference(x, w1, w2):
    """Pure-JAX reference matching the PyTorch forward."""
    y = jnp.mean(x, axis=(2, 3))                 # (B, C)
    y = jnp.maximum(y @ w1.T, 0.0)               # (B, Cr)
    y = y @ w2.T                                 # (B, C)
    y = jnp.clip(y + 3.0, 0.0, 6.0) / 6.0        # hsigmoid
    return x * y[:, :, None, None]


if __name__ == "__main__":
    B, C, H, W = 2, 4, 16, 16
    reduction = 4
    Cr = C // reduction

    key = jax.random.PRNGKey(0)
    kx, k1, k2 = jax.random.split(key, 3)
    x = jax.random.normal(kx, (B, C, H, W), dtype=jnp.float32)
    # Deterministic synthetic weights with the shapes nn.Linear would create.
    w1 = jax.random.normal(k1, (Cr, C), dtype=jnp.float32) * 0.5   # fc1: C -> C//4
    w2 = jax.random.normal(k2, (C, Cr), dtype=jnp.float32) * 0.5   # fc2: C//4 -> C

    out = se_module(x, w1, w2)
    out = jax.block_until_ready(out)

    ref = se_reference(x, w1, w2)
    assert out.shape == (B, C, H, W)
    assert jnp.allclose(out, ref, atol=1e-5, rtol=1e-5), "mismatch vs reference"

    print("KERNEL_OK")
</pallas_src>

<mosaic_0001>
module attributes {stable_mosaic.version = 11 : i64} {
  func.func @se_kernel(%arg0: i32, %arg1: memref<1x4x256xf32, #tpu.memory_space<vmem>>, %arg2: memref<4x1xf32, #tpu.memory_space<vmem>>, %arg3: memref<1x4xf32, #tpu.memory_space<vmem>>, %arg4: memref<1x4x256xf32, #tpu.memory_space<vmem>>) attributes {dimension_semantics = [#tpu.dimension_semantics<parallel>], iteration_bounds = array<i64: 2>, scalar_prefetch = 0 : i64, scratch_operands = 0 : i64, tpu.core_type = #tpu.core_type<tc>, window_params = [{transform_indices = @transform_0, window_bounds = array<i64: 1, 4, 256>}, {pipeline_mode = #tpu.pipeline_mode<synchronous>, transform_indices = @transform_1, window_bounds = array<i64: 4, 1>}, {pipeline_mode = #tpu.pipeline_mode<synchronous>, transform_indices = @transform_2, window_bounds = array<i64: 1, 4>}, {transform_indices = @transform_3, window_bounds = array<i64: 1, 4, 256>}]} {
    %c0 = arith.constant 0 : index
    %c0_0 = arith.constant 0 : index
    %c0_1 = arith.constant 0 : index
    %0 = vector.load %arg1[%c0, %c0_0, %c0_1] : memref<1x4x256xf32, #tpu.memory_space<vmem>>, vector<1x4x256xf32>
    %cst = arith.constant dense<0.000000e+00> : vector<1x4xf32>
    %1 = vector.multi_reduction <add>, %0, %cst [2] : vector<1x4x256xf32> to vector<1x4xf32>
    %cst_2 = arith.constant 3.906250e-03 : f32
    %2 = vector.broadcast %cst_2 : f32 to vector<1x4xf32>
    %3 = arith.mulf %1, %2 : vector<1x4xf32>
    %c0_3 = arith.constant 0 : index
    %c0_4 = arith.constant 0 : index
    %4 = vector.load %arg2[%c0_3, %c0_4] : memref<4x1xf32, #tpu.memory_space<vmem>>, vector<4x1xf32>
    %cst_5 = arith.constant dense<0.000000e+00> : vector<1x1xf32>
    %5 = tpu.matmul %3, %4, %cst_5 {dimension_numbers = #tpu.dot_dimension_numbers<[1], [0], [0], [1], [0, 0, 1, 1], [], []>} : vector<1x4xf32>, vector<4x1xf32>, vector<1x1xf32> -> vector<1x1xf32>
    %cst_6 = arith.constant 0.000000e+00 : f32
    %6 = vector.broadcast %cst_6 : f32 to vector<1x1xf32>
    %7 = arith.maximumf %5, %6 : vector<1x1xf32>
    %c0_7 = arith.constant 0 : index
    %c0_8 = arith.constant 0 : index
    %8 = vector.load %arg3[%c0_7, %c0_8] : memref<1x4xf32, #tpu.memory_space<vmem>>, vector<1x4xf32>
    %cst_9 = arith.constant dense<0.000000e+00> : vector<1x4xf32>
    %9 = tpu.matmul %7, %8, %cst_9 {dimension_numbers = #tpu.dot_dimension_numbers<[1], [0], [0], [1], [0, 0, 1, 1], [], []>} : vector<1x1xf32>, vector<1x4xf32>, vector<1x4xf32> -> vector<1x4xf32>
    %cst_10 = arith.constant 3.000000e+00 : f32
    %10 = vector.broadcast %cst_10 : f32 to vector<1x4xf32>
    %11 = arith.addf %9, %10 : vector<1x4xf32>
    %cst_11 = arith.constant 0.000000e+00 : f32
    %cst_12 = arith.constant 6.000000e+00 : f32
    %12 = vector.broadcast %cst_11 : f32 to vector<1x4xf32>
    %13 = arith.maximumf %12, %11 : vector<1x4xf32>
    %14 = vector.broadcast %cst_12 : f32 to vector<1x4xf32>
    %15 = arith.minimumf %14, %13 : vector<1x4xf32>
    %cst_13 = arith.constant 0.166666672 : f32
    %16 = vector.broadcast %cst_13 : f32 to vector<1x4xf32>
    %17 = arith.mulf %15, %16 : vector<1x4xf32>
    %c0_14 = arith.constant 0 : index
    %c0_15 = arith.constant 0 : index
    %c0_16 = arith.constant 0 : index
    %18 = vector.load %arg1[%c0_14, %c0_15, %c0_16] : memref<1x4x256xf32, #tpu.memory_space<vmem>>, vector<1x4x256xf32>
    %19 = vector.shape_cast %17 : vector<1x4xf32> to vector<1x4x1xf32>
    %20 = vector.broadcast %19 : vector<1x4x1xf32> to vector<1x4x256xf32>
    %21 = arith.mulf %18, %20 : vector<1x4x256xf32>
    %c0_17 = arith.constant 0 : index
    %c0_18 = arith.constant 0 : index
    %c0_19 = arith.constant 0 : index
    %22 = vector.load %arg4[%c0_17, %c0_18, %c0_19] : memref<1x4x256xf32, #tpu.memory_space<vmem>>, vector<1x4x256xf32>
    tpu.vector_store %arg4[%c0_17, %c0_18, %c0_19], %21 {strides = array<i32>} : memref<1x4x256xf32, #tpu.memory_space<vmem>>, vector<1x4x256xf32>,
    return
  }
  func.func @transform_0(%arg0: i32) -> (i32, i32, i32) {
    %c0_i32 = arith.constant 0 : i32
    %c0_i32_0 = arith.constant 0 : i32
    %c0_i32_1 = arith.constant 0 : i32
    return %arg0, %c0_i32, %c0_i32_0 : i32, i32, i32
  }
  func.func @transform_1(%arg0: i32) -> (i32, i32) {
    %c0_i32 = arith.constant 0 : i32
    %c0_i32_0 = arith.constant 0 : i32
    %c0_i32_1 = arith.constant 0 : i32
    return %c0_i32, %c0_i32_0 : i32, i32
  }
  func.func @transform_2(%arg0: i32) -> (i32, i32) {
    %c0_i32 = arith.constant 0 : i32
    %c0_i32_0 = arith.constant 0 : i32
    %c0_i32_1 = arith.constant 0 : i32
    return %c0_i32, %c0_i32_0 : i32, i32
  }
  func.func @transform_3(%arg0: i32) -> (i32, i32, i32) {
    %c0_i32 = arith.constant 0 : i32
    %c0_i32_0 = arith.constant 0 : i32
    %c0_i32_1 = arith.constant 0 : i32
    return %arg0, %c0_i32, %c0_i32_0 : i32, i32, i32
  }
}

</mosaic_0001>

<llo_original>
// kernel: tpu_custom_call.1
$region0: #{tpu_custom_call.1}
  #allocation0 [shape = 'u32[]', space=smem, size = 0x4, offset = 0x4, fixed_abs, tag = 'smem constant byte address 0x4 - core index']
  #allocation1 [shape = 'u32[144,128]{1,0:T(1,128)}', space=vmem, size = 0x12000, scoped, tag = 'internal scratch']
  %s0 = inlined_call_operand.hbm [shape: f32[2,4,256], index: 0, kind: input, shape index: {}]
  %s1 = inlined_call_operand.vmem [shape: f32[4,1], index: 1, kind: input, shape index: {}]
  %s2 = inlined_call_operand.vmem [shape: f32[1,4], index: 2, kind: input, shape index: {}]
  %s3 = inlined_call_operand.hbm [shape: f32[2,4,256], index: 3, kind: output, shape index: {}]
  %s4 = sld [smem:[#allocation0]]
  $region49: #{tpu_custom_call.1} parent=0
    _
  %s6 = ssub.s32 1, %s4
  %s7 = scalar_select 0, %s6, %s4
  $region1: #{tpu_custom_call.1} parent=0
    #allocation2 [shape = 'u8[8192]{0}', space=vmem, size = 0x2000, scoped, tag = 'input window, operand 0']
    #allocation3 [shape = 's32[2]{0}', space=sflag, size = 0x8, scoped, tag = 'scoped memory for tpu_custom_call.1']
    #allocation4 [shape = 's32[2]{0}', space=sflag, size = 0x8, scoped, tag = 'scoped memory for tpu_custom_call.1']
    #allocation5 [shape = 'u8[8192]{0}', space=vmem, size = 0x2000, scoped, tag = 'output window, operand 0']
    %8 = vsyncpa [#allocation3], 0
    %s9 = scalar_lea.sflag [#allocation3], 1
    %10 = vsyncpa %s9, 0
    %11 = vsyncpa [#allocation4], 0
    %s12 = scalar_lea.sflag [#allocation4], 1
    %13 = vsyncpa %s12, 0
    loop: start=0, step=1, limit=4
    $region2: #{tpu_custom_call.1} parent=1 // loop_pre_header
      _
    $region3: #{tpu_custom_call.1} parent=1 // loop_header
      %s15 = sphi 0, %s19
      %p16 = scmp.ge.s32.totalorder %s15, 4
      %s25 = sphi 0, %s27
      %s28 = sphi 0, %s25
      %s29 = sphi 0, %s28
      %s45 = sphi 0, %s29
      %s49 = sphi 0, %s49
      %s51 = sphi 0, %s49
      %s52 = sphi 0, %s51
      %s66 = sphi 0, %s52
      %s70 = sphi 0, %s70
      %s72 = sphi 0, %s70
      %s73 = sphi 0, %s72
      %s87 = sphi 0, %s73
      %s93 = sphi 0, %s95
      %s96 = sphi 0, %s93
      %s97 = sphi 0, %s96
      %s113 = sphi 0, %s97
    $region4: #{tpu_custom_call.1} parent=1 // loop_header_branch
      %18 = sbr.rel (%p16) target = $region8
    $region5: #{tpu_custom_call.1} parent=1 // loop_body
      %s20 = ssub.s32 %s15, 1
      %s21 = ssub.s32 %s15, 2
      %s22 = sadd.s32 %s15, 1
      %s23 = ssub.s32 %s15, %s22
      %p24 = scmp.eq.s32.totalorder %s23, 0
      %s26 = sadd.s32 %s25, 1
      %s27 = scalar_select %p24, %s25, %s26
      %p30 = pneg %p24
      %p31 = scmp.eq.s32.totalorder %s15, 1
      %p32 = por %p30, %p31
      %p33 = scmp.ne.s32.totalorder %s25, %s28
      %p34 = scmp.eq.s32.totalorder %s15, 0
      %p35 = por %p33, %p34
      %p36 = scmp.ne.s32.totalorder %s25, %s28
      %p37 = scmp.eq.s32.totalorder %s20, 1
      %p38 = por %p36, %p37
      %p39 = scmp.ne.s32.totalorder %s28, %s29
      %p40 = scmp.eq.s32.totalorder %s20, 0
      %p41 = por %p39, %p40
      %p42 = scmp.ne.s32.totalorder %s28, %s29
      %p43 = scmp.eq.s32.totalorder %s21, 1
      %p44 = por %p42, %p43
      %p46 = scmp.ne.s32.totalorder %s29, %s45
      %p47 = scmp.eq.s32.totalorder %s21, 0
      %p48 = por %p46, %p47
      %s50 = sadd.s32 %s49, 1
      %p53 = scmp.eq.s32.totalorder %s15, 1
      %p54 = scmp.ne.s32.totalorder %s49, %s51
      %p55 = scmp.eq.s32.totalorder %s15, 0
      %p56 = por %p54, %p55
      %p57 = scmp.ne.s32.totalorder %s49, %s51
      %p58 = scmp.eq.s32.totalorder %s20, 1
      %p59 = por %p57, %p58
      %p60 = scmp.ne.s32.totalorder %s51, %s52
      %p61 = scmp.eq.s32.totalorder %s20, 0
      %p62 = por %p60, %p61
      %p63 = scmp.ne.s32.totalorder %s51, %s52
      %p64 = scmp.eq.s32.totalorder %s21, 1
      %p65 = por %p63, %p64
      %p67 = scmp.ne.s32.totalorder %s52, %s66
      %p68 = scmp.eq.s32.totalorder %s21, 0
      %p69 = por %p67, %p68
      %s71 = sadd.s32 %s70, 1
      %p74 = scmp.eq.s32.totalorder %s15, 1
      %p75 = scmp.ne.s32.totalorder %s70, %s72
      %p76 = scmp.eq.s32.totalorder %s15, 0
      %p77 = por %p75, %p76
      %p78 = scmp.ne.s32.totalorder %s70, %s72
      %p79 = scmp.eq.s32.totalorder %s20, 1
      %p80 = por %p78, %p79
      %p81 = scmp.ne.s32.totalorder %s72, %s73
      %p82 = scmp.eq.s32.totalorder %s20, 0
      %p83 = por %p81, %p82
      %p84 = scmp.ne.s32.totalorder %s72, %s73
      %p85 = scmp.eq.s32.totalorder %s21, 1
      %p86 = por %p84, %p85
      %p88 = scmp.ne.s32.totalorder %s73, %s87
      %p89 = scmp.eq.s32.totalorder %s21, 0
      %p90 = por %p88, %p89
      %s91 = ssub.s32 %s15, %s22
      %p92 = scmp.eq.s32.totalorder %s91, 0
      %s94 = sadd.s32 %s93, 1
      %s95 = scalar_select %p92, %s93, %s94
      %p98 = pneg %p92
      %p99 = scmp.eq.s32.totalorder %s15, 1
      %p100 = por %p98, %p99
      %p101 = scmp.ne.s32.totalorder %s93, %s96
      %p102 = scmp.eq.s32.totalorder %s15, 0
      %p103 = por %p101, %p102
      %p104 = scmp.ne.s32.totalorder %s93, %s96
      %p105 = scmp.eq.s32.totalorder %s20, 1
      %p106 = por %p104, %p105
      %p107 = scmp.ne.s32.totalorder %s96, %s97
      %p108 = scmp.eq.s32.totalorder %s20, 0
      %p109 = por %p107, %p108
      %p110 = scmp.ne.s32.totalorder %s96, %s97
      %p111 = scmp.eq.s32.totalorder %s21, 1
      %p112 = por %p110, %p111
      %p114 = scmp.ne.s32.totalorder %s97, %s113
      %p115 = scmp.eq.s32.totalorder %s21, 0
      %p116 = por %p114, %p115
      %p117 = scmp.le.s32.totalorder 1, %s15
      %p118 = scmp.lt.s32.totalorder %s15, 3
      %p119 = pnand %p117, %p118
      %p120 = pneg %p119
      // Predicated region
      $region9: #{tpu_custom_call.1} parent=5 // pred_check
        _
      $region10: #{tpu_custom_call.1} parent=5 // pred_check_branch
        %122 = sbr.rel (%p119) target = $region12
      $region11: #{tpu_custom_call.1} parent=5 // pred_region
        %s123 = ssub.s32 %s15, 1
        // Predicated region
        $region13: #{tpu_custom_call.1} parent=11 // pred_check
          %p124 = pneg %p62
        $region14: #{tpu_custom_call.1} parent=11 // pred_check_branch
          %126 = sbr.rel (%p124) target = $region16
        $region15: #{tpu_custom_call.1} parent=11 // pred_region
          _
        $region16: #{tpu_custom_call.1} parent=11 // pred_fallthru
          _
        // Predicated region
        $region17: #{tpu_custom_call.1} parent=11 // pred_check
          %p127 = pneg %p83
        $region18: #{tpu_custom_call.1} parent=11 // pred_check_branch
          %129 = sbr.rel (%p127) target = $region20
        $region19: #{tpu_custom_call.1} parent=11 // pred_region
          _
        $region20: #{tpu_custom_call.1} parent=11 // pred_fallthru
          _
      $region12: #{tpu_custom_call.1} parent=5 // pred_fallthru
        _
      %p130 = scmp.lt.s32.totalorder %s15, 2
      // Predicated region
      $region21: #{tpu_custom_call.1} parent=5 // pred_check
        %p131 = pneg %p130
      $region22: #{tpu_custom_call.1} parent=5 // pred_check_branch
        %133 = sbr.rel (%p131) target = $region24
      $region23: #{tpu_custom_call.1} parent=5 // pred_region
        // Predicated region
        $region25: #{tpu_custom_call.1} parent=23 // pred_check
          %p134 = pneg %p35
        $region26: #{tpu_custom_call.1} parent=23 // pred_check_branch
          %136 = sbr.rel (%p134) target = $region28
        $region27: #{tpu_custom_call.1} parent=23 // pred_region
          %s137 = sand.u32 %s25, 1
          %s138 = scalar_lea.sflag [#allocation3], %s137
          %s139 = sand.u32 %s25, 1
          %s140 = smul.addr %s139, 8
          %s141 = scalar_lea.vmem [#allocation2], %s140
          %s143 = ssub.s32 128, 128
          %144 = vsyncadd %s138, %s143
          %s145 = smul.addr %s15, 2
          %s146 = smul.addr %s145, 64
          %s147 = scalar_lea.hbm %s0, %s146
          %s149 = sshll.u32 %s141, 4
          %s150 = int_to_ptr.vmem [resolvable:$true] %s149
          %152 = dma.hbm_to_vmem [thread:$0]  %s147, 128, %s150, %s138
        $region28: #{tpu_custom_call.1} parent=23 // pred_fallthru
          _
      $region24: #{tpu_custom_call.1} parent=5 // pred_fallthru
        _
      %p153 = scmp.le.s32.totalorder 1, %s15
      %p154 = scmp.lt.s32.totalorder %s15, 3
      %p155 = pnand %p153, %p154
      %p156 = pneg %p155
      // Predicated region
      $region29: #{tpu_custom_call.1} parent=5 // pred_check
        _
      $region30: #{tpu_custom_call.1} parent=5 // pred_check_branch
        %158 = sbr.rel (%p155) target = $region32
      $region31: #{tpu_custom_call.1} parent=5 // pred_region
        %s159 = ssub.s32 %s15, 1
        %s160 = sand.u32 %s28, 1
        %s161 = scalar_lea.sflag [#allocation3], %s160
        %s162 = sand.u32 %s28, 1
        %s163 = smul.addr %s162, 8
        %s164 = scalar_lea.vmem [#allocation2], %s163
        // Predicated region
        $region33: #{tpu_custom_call.1} parent=31 // pred_check
          %p165 = pneg %p41
        $region34: #{tpu_custom_call.1} parent=31 // pred_check_branch
          %167 = sbr.rel (%p165) target = $region36
        $region35: #{tpu_custom_call.1} parent=31 // pred_region
          %168 = dma.done %s161, 128
        $region36: #{tpu_custom_call.1} parent=31 // pred_fallthru
          _
        %s169 = sand.u32 %s28, 1
        %s170 = scalar_lea.sflag [#allocation3], %s169
        %s171 = sand.u32 %s28, 1
        %s172 = smul.addr %s171, 8
        %s173 = scalar_lea.vmem [#allocation2], %s172
        %p174 = pneg %p41
        %p175 = pneg %p38
        %p176 = pneg %p62
        %p177 = pneg %p59
        %p178 = pneg %p83
        %p179 = pneg %p80
        %p180 = pneg %p109
        %p181 = pneg %p106
        %s182 = sand.u32 %s96, 1
        %s183 = scalar_lea.sflag [#allocation4], %s182
        %s184 = sand.u32 %s96, 1
        %s185 = smul.addr %s184, 8
        %s186 = scalar_lea.vmem [#allocation5], %s185
        %v187 = vld [vmem:[%s164] sm:$0xff]
        %v189 = vcombine.high %v187, %v187
        %vm191 = vcmask 1043456
        %v192 = vsel %vm191, %v187, 0.0
        %v193 = vsel %vm191, %v189, 0.0
        %v194 = vadd.f32 %v192, %v193
        %195 = vadd.xlane.f32.xlu0 %v194
        %v196 = vpop.xlane.xlu0 %195
        %v197 = vmul.f32 %v196, 0.00390625
        %v198 = vld [vmem:[%s1] sm:$0xf]
        %v200 = vlaneseq
        %v201 = vand.u32 %v200, 127
        %v202 = vlaneseq
        %v203 = vshrl.u32 %v202, 7
        %v204 = vsub.s32 %v201, %v203
        %v205 = vrot.slane %v197, %v204
        %vm206 = vcmask 31744
        %v207 = vsel %vm206, %v205, 0
        %v210 = vsel %vm191, %v198, 0
        %212 = vmatprep.subr.mxu0 0.0
        %213 = vmatpush1.msra.mxu0 %v210
        %214 = vmatprep.subr.mxu0 0.0
        %215 = vmatpush1.msra.mxu0 0.0
        %216 = vmatprep.subr.mxu0 0.0
        %217 = vmatpush1.msra.mxu0 0.0
        %218 = vmatprep.subr.mxu0 0.0
        %219 = vmatpush1.msra.mxu0 0.0
        %220 = vmatprep.subr.mxu0 0.0
        %221 = vmatpush1.msra.mxu0 0.0
        %222 = vmatprep.subr.mxu0 0.0
        %223 = vmatpush1.msra.mxu0 0.0
        %224 = vmatprep.subr.mxu0 0.0
        %225 = vmatpush1.msra.mxu0 0.0
        %226 = vmatprep.subr.mxu0 0.0
        %227 = vmatpush1.msra.mxu0 0.0
        %228 = vmatprep.subr.mxu0 0.0
        %229 = vmatpush1.msra.mxu0 0.0
        %230 = vmatprep.subr.mxu0 0.0
        %231 = vmatpush1.msra.mxu0 0.0
        %232 = vmatprep.subr.mxu0 0.0
        %233 = vmatpush1.msra.mxu0 0.0
        %234 = vmatprep.subr.mxu0 0.0
        %235 = vmatpush1.msra.mxu0 0.0
        %236 = vmatprep.subr.mxu0 0.0
        %237 = vmatpush1.msra.mxu0 0.0
        %238 = vmatprep.subr.mxu0 0.0
        %239 = vmatpush1.msra.mxu0 0.0
        %240 = vmatprep.subr.mxu0 0.0
        %241 = vmatpush1.msra.mxu0 0.0
        %242 = vmatprep.subr.mxu0 0.0
        %243 = vmatpush1.msra.mxu0 0.0
        %244 = vmatprep.subr.mxu0 0.0
        %245 = vmatpush1.msra.mxu0 0.0
        %246 = vmatprep.subr.mxu0 0.0
        %247 = vmatpush1.msra.mxu0 0.0
        %248 = vmatprep.subr.mxu0 0.0
        %249 = vmatpush1.msra.mxu0 0.0
        %250 = vmatprep.subr.mxu0 0.0
        %251 = vmatpush1.msra.mxu0 0.0
        %252 = vmatprep.subr.mxu0 0.0
        %253 = vmatpush1.msra.mxu0 0.0
        %254 = vmatprep.subr.mxu0 0.0
        %255 = vmatpush1.msra.mxu0 0.0
        %256 = vmatprep.subr.mxu0 0.0
        %257 = vmatpush1.msra.mxu0 0.0
        %258 = vmatprep.subr.mxu0 0.0
        %259 = vmatpush1.msra.mxu0 0.0
        %260 = vmatprep.subr.mxu0 0.0
        %261 = vmatpush1.msra.mxu0 0.0
        %262 = vmatprep.subr.mxu0 0.0
        %263 = vmatpush1.msra.mxu0 0.0
        %264 = vmatprep.subr.mxu0 0.0
        %265 = vmatpush1.msra.mxu0 0.0
        %266 = vmatprep.subr.mxu0 0.0
        %267 = vmatpush1.msra.mxu0 0.0
        %268 = vmatprep.subr.mxu0 0.0
        %269 = vmatpush1.msra.mxu0 0.0
        %270 = vmatprep.subr.mxu0 0.0
        %271 = vmatpush1.msra.mxu0 0.0
        %272 = vmatprep.subr.mxu0 0.0
        %273 = vmatpush1.msra.mxu0 0.0
        %274 = vmatprep.subr.mxu0 0.0
        %275 = vmatpush1.msra.mxu0 0.0
        %276 = vmatprep.mubr.f32.mxu0 0.0
        %277 = vmatmul.mubr.f32.gmra.mrb[0].mxu0 %v207
        %v278 = vpop.f32.mrb[0].mxu0
        %v279 = vadd.f32 0.0, %v278
        %v280 = vpop.f32.mrb[0].mxu0
        %281 = vdwg.mxu0
        %v282 = vmax.f32 %v279, 0.0
        %v283 = vld [vmem:[%s2] sm:$0x1]
        %vm284 = vcmask 7168
        %v286 = vsel %vm284, %v282, 0
        %vm288 = vcmask 1040384
        %v290 = vsel %vm288, %v283, 0
        %292 = vmatprep.subr.mxu0 0.0
        %293 = vmatpush1.msra.mxu0 %v290
        %294 = vmatprep.subr.mxu0 0.0
        %295 = vmatpush1.msra.mxu0 0.0
        %296 = vmatprep.subr.mxu0 0.0
        %297 = vmatpush1.msra.mxu0 0.0
        %298 = vmatprep.subr.mxu0 0.0
        %299 = vmatpush1.msra.mxu0 0.0
        %300 = vmatprep.subr.mxu0 0.0
        %301 = vmatpush1.msra.mxu0 0.0
        %302 = vmatprep.subr.mxu0 0.0
        %303 = vmatpush1.msra.mxu0 0.0
        %304 = vmatprep.subr.mxu0 0.0
        %305 = vmatpush1.msra.mxu0 0.0
        %306 = vmatprep.subr.mxu0 0.0
        %307 = vmatpush1.msra.mxu0 0.0
        %308 = vmatprep.subr.mxu0 0.0
        %309 = vmatpush1.msra.mxu0 0.0
        %310 = vmatprep.subr.mxu0 0.0
        %311 = vmatpush1.msra.mxu0 0.0
        %312 = vmatprep.subr.mxu0 0.0
        %313 = vmatpush1.msra.mxu0 0.0
        %314 = vmatprep.subr.mxu0 0.0
        %315 = vmatpush1.msra.mxu0 0.0
        %316 = vmatprep.subr.mxu0 0.0
        %317 = vmatpush1.msra.mxu0 0.0
        %318 = vmatprep.subr.mxu0 0.0
        %319 = vmatpush1.msra.mxu0 0.0
        %320 = vmatprep.subr.mxu0 0.0
        %321 = vmatpush1.msra.mxu0 0.0
        %322 = vmatprep.subr.mxu0 0.0
        %323 = vmatpush1.msra.mxu0 0.0
        %324 = vmatprep.subr.mxu0 0.0
        %325 = vmatpush1.msra.mxu0 0.0
        %326 = vmatprep.subr.mxu0 0.0
        %327 = vmatpush1.msra.mxu0 0.0
        %328 = vmatprep.subr.mxu0 0.0
        %329 = vmatpush1.msra.mxu0 0.0
        %330 = vmatprep.subr.mxu0 0.0
        %331 = vmatpush1.msra.mxu0 0.0
        %332 = vmatprep.subr.mxu0 0.0
        %333 = vmatpush1.msra.mxu0 0.0
        %334 = vmatprep.subr.mxu0 0.0
        %335 = vmatpush1.msra.mxu0 0.0
        %336 = vmatprep.subr.mxu0 0.0
        %337 = vmatpush1.msra.mxu0 0.0
        %338 = vmatprep.subr.mxu0 0.0
        %339 = vmatpush1.msra.mxu0 0.0
        %340 = vmatprep.subr.mxu0 0.0
        %341 = vmatpush1.msra.mxu0 0.0
        %342 = vmatprep.subr.mxu0 0.0
        %343 = vmatpush1.msra.mxu0 0.0
        %344 = vmatprep.subr.mxu0 0.0
        %345 = vmatpush1.msra.mxu0 0.0
        %346 = vmatprep.subr.mxu0 0.0
        %347 = vmatpush1.msra.mxu0 0.0
        %348 = vmatprep.subr.mxu0 0.0
        %349 = vmatpush1.msra.mxu0 0.0
        %350 = vmatprep.subr.mxu0 0.0
        %351 = vmatpush1.msra.mxu0 0.0
        %352 = vmatprep.subr.mxu0 0.0
        %353 = vmatpush1.msra.mxu0 0.0
        %354 = vmatprep.subr.mxu0 0.0
        %355 = vmatpush1.msra.mxu0 0.0
        %356 = vmatprep.mubr.f32.mxu0 0.0
        %357 = vmatmul.mubr.f32.gmra.mrb[0].mxu0 %v286
        %v358 = vpop.f32.mrb[0].mxu0
        %v359 = vadd.f32 3.0, %v358
        %v360 = vpop.f32.mrb[0].mxu0
        %361 = vdwg.mxu0
        %v362 = vmax.f32 %v359, 0.0
        %v363 = vmin.f32 %v362, 6.0
        %v364 = vmul.f32 %v363, 0.16666667
        %v365 = vlaneseq
        %v366 = vshrl.u32 %v365, 7
        %v367 = vsub.s32 0, %v366
        %v368 = vrot.slane %v364, %v367
        %370 = vbcast.lane.b32.xlu0 %v368, 256
        %v371 = vpop.permute.xlu0 %370
        %v374 = vunpack.c.l.s4 839922192
        %v375 = vunpack.c.0.s8 %v374
        %v376 = vlaneseq
        %v377 = vshrl.u32 %v376, 7
        %v378 = vsub.s32 %v375, %v377
        %v379 = vrot.slane %v371, %v378
        %v381 = vmul.f32 %v187, %v379
        %382 = vst [vmem:[%s186] sm:$0xff] %v381
        %s383 = sand.u32 %s96, 1
        %s384 = scalar_lea.sflag [#allocation4], %s383
        %s385 = sand.u32 %s96, 1
        %s386 = smul.addr %s385, 8
        %s387 = scalar_lea.vmem [#allocation5], %s386
        // Predicated region
        $region37: #{tpu_custom_call.1} parent=31 // pred_check
          %p388 = pneg %p106
        $region38: #{tpu_custom_call.1} parent=31 // pred_check_branch
          %390 = sbr.rel (%p388) target = $region40
        $region39: #{tpu_custom_call.1} parent=31 // pred_region
          %s392 = ssub.s32 128, 128
          %393 = vsyncadd %s384, %s392
          %s394 = smul.addr %s20, 2
          %s395 = smul.addr %s394, 64
          %s396 = scalar_lea.hbm %s3, %s395
          %s398 = sshll.u32 %s387, 4
          %s399 = int_to_ptr.vmem [resolvable:$true] %s398
          %401 = dma.vmem_to_hbm [thread:$0]  %s399, 128, %s396, %s384
        $region40: #{tpu_custom_call.1} parent=31 // pred_fallthru
          _
      $region32: #{tpu_custom_call.1} parent=5 // pred_fallthru
        _
      %p402 = scmp.le.s32.totalorder 2, %s15
      // Predicated region
      $region41: #{tpu_custom_call.1} parent=5 // pred_check
        %p403 = pneg %p402
      $region42: #{tpu_custom_call.1} parent=5 // pred_check_branch
        %405 = sbr.rel (%p403) target = $region44
      $region43: #{tpu_custom_call.1} parent=5 // pred_region
        %s406 = ssub.s32 %s15, 2
        // Predicated region
        $region45: #{tpu_custom_call.1} parent=43 // pred_check
          %p407 = pneg %p112
        $region46: #{tpu_custom_call.1} parent=43 // pred_check_branch
          %409 = sbr.rel (%p407) target = $region48
        $region47: #{tpu_custom_call.1} parent=43 // pred_region
          %s410 = sand.u32 %s97, 1
          %s411 = scalar_lea.sflag [#allocation4], %s410
          %s412 = sand.u32 %s97, 1
          %s413 = smul.addr %s412, 8
          %s414 = scalar_lea.vmem [#allocation5], %s413
          %415 = dma.done %s411, 128
        $region48: #{tpu_custom_call.1} parent=43 // pred_fallthru
          _
      $region44: #{tpu_custom_call.1} parent=5 // pred_fallthru
        _
    $region6: #{tpu_custom_call.1} parent=1 // loop_footer
      %s19 = sadd.s32 1, %s15
    $region7: #{tpu_custom_call.1} parent=1 // loop_footer_branch
      %14 = sbr.rel target = $region3
    $region8: #{tpu_custom_call.1} parent=1 // loop_exit
      _
    %416 = vsyncpa [#allocation3], 1
    %s417 = scalar_lea.sflag [#allocation3], 1
    %418 = vsyncpa %s417, 1
    %419 = vsyncpa [#allocation4], 1
    %s420 = scalar_lea.sflag [#allocation4], 1
    %421 = vsyncpa %s420, 1

</llo_original>
